<compile_context>
chip_gen: v7x
topology: tpu7x:2x2x1
jax: 0.10.0
libtpu: 0.0.40
codegen_flags: <defaults>
</compile_context>

<pallas_src>
import jax
import jax.numpy as jnp
from jax.experimental import pallas as pl
from jax.experimental.pallas import tpu as pltpu


# ----------------------------- Pallas kernel ------------------------------ #

def _conv_bn_kernel(p_ref, w_ref, shift_ref, o_ref):
    # p_ref:     (tm, Kp)  im2col row tile, native (bf16) dtype
    # w_ref:     (Kp, tn)  conv weight tile with BN scale pre-folded (bf16)
    # shift_ref: (1,  tn)  BN shift (f32)
    # o_ref:     (tm, tn)  output tile
    acc = jnp.dot(p_ref[...], w_ref[...], preferred_element_type=jnp.float32)
    o_ref[...] = (acc + shift_ref[...]).astype(o_ref.dtype)


# ------------------------------ host helpers ------------------------------ #

def _im2col(x_nchw, kh, kw, stride, padding, dilation):
    """(B,Cin,H,W) -> ((B*Hout*Wout, kh*kw*Cin), Hout, Wout). Layout only."""
    B, Cin, H, W = x_nchw.shape
    x_nhwc = jnp.transpose(x_nchw, (0, 2, 3, 1))
    if padding > 0:
        x_nhwc = jnp.pad(
            x_nhwc, ((0, 0), (padding, padding), (padding, padding), (0, 0)))
    Hp, Wp = H + 2 * padding, W + 2 * padding
    Hout = (Hp - (dilation * (kh - 1) + 1)) // stride + 1
    Wout = (Wp - (dilation * (kw - 1) + 1)) // stride + 1
    cols = []
    for i in range(kh):
        for j in range(kw):
            h0, w0 = i * dilation, j * dilation
            cols.append(
                x_nhwc[:, h0:h0 + (Hout - 1) * stride + 1:stride,
                          w0:w0 + (Wout - 1) * stride + 1:stride, :])
    patches = jnp.concatenate(cols, axis=-1)        # (B,Hout,Wout,kh*kw*Cin)
    return patches.reshape(B * Hout * Wout, kh * kw * Cin), Hout, Wout


def _bn_affine(gamma, beta, running_mean, running_var, eps):
    scale = gamma.astype(jnp.float32) * jax.lax.rsqrt(
        running_var.astype(jnp.float32) + eps)
    shift = beta.astype(jnp.float32) - running_mean.astype(jnp.float32) * scale
    return scale, shift


def _vmem_capacity_bytes():
    """Generation-aware VMEM capacity (falls back to the v7x 64 MiB floor)."""
    try:
        return int(pltpu.get_tpu_info().vmem_capacity_bytes)
    except Exception:
        return 64 << 20


# ------------------------------- entry point ------------------------------ #

def basic_conv2d_pallas(x, w, gamma, beta, running_mean, running_var, *,
                        stride=1, padding=0, dilation=1, groups=1,
                        eps=1e-5, compute_dtype=jnp.bfloat16, out_dtype=None,
                        tm=None, tn=None):
    """x: (B,Cin,H,W) NCHW; w: (Cout,Cin,kh,kw) torch layout. Returns NCHW."""
    if groups != 1:
        raise NotImplementedError("groups > 1 not supported")
    B, Cin, H, W = x.shape
    Cout, Cin_w, kh, kw = w.shape
    assert Cin_w == Cin
    if out_dtype is None:
        out_dtype = x.dtype

    # --- im2col (bf16) + BN-scale-folded weight matrix + shift ---
    patches, Hout, Wout = _im2col(x.astype(compute_dtype), kh, kw,
                                  stride, padding, dilation)
    M, K = patches.shape
    scale, shift = _bn_affine(gamma, beta, running_mean, running_var, eps)
    w_mat = jnp.transpose(w, (2, 3, 1, 0)).reshape(K, Cout)   # (kh*kw*Cin, Cout)
    w_mat = (w_mat.astype(jnp.float32) * scale[None, :]).astype(compute_dtype)

    # --- padding policy ---
    # K: only pad to 128 when nearly free, otherwise pass at full size
    # (BlockSpec accepts a full-extent dim; avoids inflating the patch stream).
    Kp128 = pl.cdiv(K, 128) * 128
    Kp = Kp128 if (Kp128 <= int(1.1 * K)) else K
    # Cout: always pad to 128 so the output tile is lane-dense (unmasked vst).
    Np = pl.cdiv(Cout, 128) * 128

    in_item = jnp.dtype(compute_dtype).itemsize
    w_item = jnp.dtype(compute_dtype).itemsize
    out_item = jnp.dtype(out_dtype).itemsize

    # --- output-channel tile ---
    if tn is None:
        tn = Np
        if Np > 512:
            for cand in (512, 384, 256, 128):
                if Np % cand == 0:
                    tn = cand
                    break

    def _vmem_need(tm_, tn_):
        return (2 * tm_ * Kp * in_item       # double-buffered patch tiles
                + 2 * tm_ * tn_ * out_item   # double-buffered output tiles
                + 2 * Kp * tn_ * w_item      # weight tiles (invariant block)
                + 4 * tn_ * 4                # shift
                + tm_ * tn_ * 4)             # f32 accumulator headroom

    budget = int(0.70 * _vmem_capacity_bytes())

    # --- row tile: largest that fits the budget; prefer >= 2 tiles (megacore) ---
    if tm is None:
        tm = 128
        for cand in (1024, 512, 256, 128):
            if cand > 128 and pl.cdiv(M, cand) < 2:
                continue
            if _vmem_need(cand, tn) <= budget:
                tm = cand
                break

    Mp = pl.cdiv(M, tm) * tm

    patches = jnp.pad(patches, ((0, Mp - M), (0, Kp - K)))
    w_mat = jnp.pad(w_mat, ((0, Kp - K), (0, Np - Cout)))
    shift = jnp.pad(shift, (0, Np - Cout)).reshape(1, Np)

    vmem_limit_bytes = int(min(budget, max(2 * _vmem_need(tm, tn), 32 << 20)))

    out = pl.pallas_call(
        _conv_bn_kernel,
        out_shape=jax.ShapeDtypeStruct((Mp, Np), out_dtype),
        grid_spec=pltpu.PrefetchScalarGridSpec(
            num_scalar_prefetch=0,
            grid=(Mp // tm, Np // tn),
            in_specs=[
                pl.BlockSpec((tm, Kp), lambda i, j: (i, 0)),   # im2col row tile
                pl.BlockSpec((Kp, tn), lambda i, j: (0, j)),   # scaled weights
                pl.BlockSpec((1, tn), lambda i, j: (0, j)),    # BN shift
            ],
            out_specs=pl.BlockSpec((tm, tn), lambda i, j: (i, j)),
        ),
        compiler_params=pltpu.CompilerParams(
            dimension_semantics=("parallel", "parallel"),
            vmem_limit_bytes=vmem_limit_bytes,
        ),
    )(patches, w_mat, shift)

    y = out[:M, :Cout].reshape(B, Hout, Wout, Cout)
    return jnp.transpose(y, (0, 3, 1, 2))                     # back to NCHW


# ------------------------------- references ------------------------------- #

def _reference_same_math(x, w, gamma, beta, rmean, rvar, *,
                         stride, padding, dilation, eps=1e-5,
                         compute_dtype=jnp.bfloat16):
    """Same bf16-operand / f32-accumulate math as the kernel, in plain JAX."""
    B, Cin, H, W = x.shape
    Cout, _, kh, kw = w.shape
    patches, Hout, Wout = _im2col(x.astype(compute_dtype), kh, kw,
                                  stride, padding, dilation)
    scale, shift = _bn_affine(gamma, beta, rmean, rvar, eps)
    w_mat = jnp.transpose(w, (2, 3, 1, 0)).reshape(kh * kw * Cin, Cout)
    w_mat = (w_mat.astype(jnp.float32) * scale[None, :]).astype(compute_dtype)
    y = patches.astype(jnp.float32) @ w_mat.astype(jnp.float32) + shift[None, :]
    return jnp.transpose(y.reshape(B, Hout, Wout, Cout),
                         (0, 3, 1, 2)).astype(x.dtype)


def _reference_conv_bn(x, w, gamma, beta, rmean, rvar, *,
                       stride, padding, dilation, groups=1, eps=1e-5):
    """Full-precision conv + BN (running stats), matching torch eval math."""
    y = jax.lax.conv_general_dilated(
        x.astype(jnp.float32), w.astype(jnp.float32),
        window_strides=(stride, stride),
        padding=[(padding, padding), (padding, padding)],
        rhs_dilation=(dilation, dilation),
        dimension_numbers=("NCHW", "OIHW", "NCHW"),
        feature_group_count=groups,
        precision=jax.lax.Precision.HIGHEST)
    s, b = _bn_affine(gamma, beta, rmean, rvar, eps)
    return y * s[None, :, None, None] + b[None, :, None, None]


# --------------------------------- main ----------------------------------- #

if __name__ == "__main__":
    key = jax.random.PRNGKey(0)
    ks = jax.random.split(key, 6)

    B, Cin, H, W = 2, 4, 16, 16
    Cout, ksz, stride, padding, dilation = 16, 3, 1, 1, 1

    x = jax.random.normal(ks[0], (B, Cin, H, W), dtype=jnp.float32)
    w = jax.random.normal(ks[1], (Cout, Cin, ksz, ksz), dtype=jnp.float32) * 0.1
    gamma = 0.5 + jax.random.uniform(ks[2], (Cout,), dtype=jnp.float32)
    beta = jax.random.normal(ks[3], (Cout,), dtype=jnp.float32) * 0.1
    running_mean = jax.random.normal(ks[4], (Cout,), dtype=jnp.float32) * 0.1
    running_var = 0.5 + jax.random.uniform(ks[5], (Cout,), dtype=jnp.float32)

    y = basic_conv2d_pallas(x, w, gamma, beta, running_mean, running_var,
                            stride=stride, padding=padding, dilation=dilation)
    y = jax.block_until_ready(y)

    y_math = _reference_same_math(x, w, gamma, beta, running_mean, running_var,
                                  stride=stride, padding=padding,
                                  dilation=dilation)
    y_conv = _reference_conv_bn(x, w, gamma, beta, running_mean, running_var,
                                stride=stride, padding=padding,
                                dilation=dilation)

    assert y.shape == (B, Cout, H, W)
    # exact-math check (same bf16 operands, f32 accumulation)
    assert jnp.allclose(y, y_math, atol=2e-3, rtol=2e-3), \
        "mismatch vs same-math (bf16) reference"
    # end-to-end sanity vs full-f32 conv+BN (bf16 quantization tolerance)
    assert jnp.allclose(y, y_conv, atol=3e-2, rtol=3e-2), \
        "mismatch vs lax.conv+BN reference"

    print("KERNEL_OK")
</pallas_src>

<mosaic_0001>
module attributes {stable_mosaic.version = 11 : i64} {
  func.func @_conv_bn_kernel(%arg0: i32, %arg1: i32, %arg2: memref<256x36xbf16, #tpu.memory_space<vmem>>, %arg3: memref<36x128xbf16, #tpu.memory_space<vmem>>, %arg4: memref<1x128xf32, #tpu.memory_space<vmem>>, %arg5: memref<256x128xf32, #tpu.memory_space<vmem>>) attributes {dimension_semantics = [#tpu.dimension_semantics<parallel>, #tpu.dimension_semantics<parallel>], iteration_bounds = array<i64: 2, 1>, scalar_prefetch = 0 : i64, scratch_operands = 0 : i64, tpu.core_type = #tpu.core_type<tc>, window_params = [{transform_indices = @transform_0, window_bounds = array<i64: 256, 36>}, {transform_indices = @transform_1, window_bounds = array<i64: 36, 128>}, {transform_indices = @transform_2, window_bounds = array<i64: 1, 128>}, {transform_indices = @transform_3, window_bounds = array<i64: 256, 128>}]} {
    %c0 = arith.constant 0 : index
    %c0_0 = arith.constant 0 : index
    %0 = vector.load %arg2[%c0, %c0_0] : memref<256x36xbf16, #tpu.memory_space<vmem>>, vector<256x36xbf16>
    %c0_1 = arith.constant 0 : index
    %c0_2 = arith.constant 0 : index
    %1 = vector.load %arg3[%c0_1, %c0_2] : memref<36x128xbf16, #tpu.memory_space<vmem>>, vector<36x128xbf16>
    %cst = arith.constant dense<0.000000e+00> : vector<256x128xf32>
    %2 = tpu.matmul %0, %1, %cst {dimension_numbers = #tpu.dot_dimension_numbers<[1], [0], [0], [1], [0, 0, 1, 1], [], []>} : vector<256x36xbf16>, vector<36x128xbf16>, vector<256x128xf32> -> vector<256x128xf32>
    %c0_3 = arith.constant 0 : index
    %c0_4 = arith.constant 0 : index
    %3 = vector.load %arg4[%c0_3, %c0_4] : memref<1x128xf32, #tpu.memory_space<vmem>>, vector<1x128xf32>
    %4 = vector.broadcast %3 : vector<1x128xf32> to vector<256x128xf32>
    %5 = arith.addf %2, %4 : vector<256x128xf32>
    %c0_5 = arith.constant 0 : index
    %c0_6 = arith.constant 0 : index
    %6 = vector.load %arg5[%c0_5, %c0_6] : memref<256x128xf32, #tpu.memory_space<vmem>>, vector<256x128xf32>
    tpu.vector_store %arg5[%c0_5, %c0_6], %5 {strides = array<i32>} : memref<256x128xf32, #tpu.memory_space<vmem>>, vector<256x128xf32>,
    return
  }
  func.func @transform_0(%arg0: i32, %arg1: i32) -> (i32, i32) {
    %c0_i32 = arith.constant 0 : i32
    %c0_i32_0 = arith.constant 0 : i32
    return %arg0, %c0_i32 : i32, i32
  }
  func.func @transform_1(%arg0: i32, %arg1: i32) -> (i32, i32) {
    %c0_i32 = arith.constant 0 : i32
    %c0_i32_0 = arith.constant 0 : i32
    return %c0_i32, %arg1 : i32, i32
  }
  func.func @transform_2(%arg0: i32, %arg1: i32) -> (i32, i32) {
    %c0_i32 = arith.constant 0 : i32
    %c0_i32_0 = arith.constant 0 : i32
    return %c0_i32, %arg1 : i32, i32
  }
  func.func @transform_3(%arg0: i32, %arg1: i32) -> (i32, i32) {
    %c0_i32 = arith.constant 0 : i32
    return %arg0, %arg1 : i32, i32
  }
}

</mosaic_0001>

<llo_original>
// kernel: tpu_custom_call.1
$region0: #{tpu_custom_call.1}
  #allocation0 [shape = 'u32[]', space=smem, size = 0x4, offset = 0x4, fixed_abs, tag = 'smem constant byte address 0x4 - core index']
  #allocation1 [shape = 'u32[144,128]{1,0:T(1,128)}', space=vmem, size = 0x12000, scoped, tag = 'internal scratch']
  %s0 = inlined_call_operand.vmem [shape: bf16[512,36], index: 0, kind: input, shape index: {}]
  %s1 = inlined_call_operand.vmem [shape: bf16[36,128], index: 1, kind: input, shape index: {}]
  %s2 = inlined_call_operand.vmem [shape: f32[1,128], index: 2, kind: input, shape index: {}]
  %s3 = inlined_call_operand.hbm [shape: f32[512,128], index: 3, kind: output, shape index: {}]
  %s4 = sld [smem:[#allocation0]]
  $region45: #{tpu_custom_call.1} parent=0
    _
  %s6 = ssub.s32 1, %s4
  %s7 = scalar_select 0, %s6, %s4
  $region1: #{tpu_custom_call.1} parent=0
    #allocation2 [shape = 'u8[262144]{0}', space=vmem, size = 0x40000, scoped, tag = 'output window, operand 0']
    #allocation3 [shape = 's32[2]{0}', space=sflag, size = 0x8, scoped, tag = 'scoped memory for tpu_custom_call.1']
    %8 = vsyncpa [#allocation3], 0
    %s9 = scalar_lea.sflag [#allocation3], 1
    %10 = vsyncpa %s9, 0
    loop: start=0, step=1, limit=4
    $region2: #{tpu_custom_call.1} parent=1 // loop_pre_header
      _
    $region3: #{tpu_custom_call.1} parent=1 // loop_header
      %s12 = sphi 0, %s16
      %p13 = scmp.ge.s32.totalorder %s12, 4
      %s19 = sphi 0, %s31
      %s20 = sphi 0, %s27
      %s21 = sphi 0, %s19
      %s22 = sphi 0, %s20
      %s23 = sphi 0, %s21
      %s24 = sphi 0, %s22
      %s34 = sphi 0, %s36
      %s37 = sphi 0, %s34
      %s38 = sphi 0, %s37
      %s54 = sphi 0, %s38
      %s60 = sphi 0, %s62
      %s63 = sphi 0, %s60
      %s64 = sphi 0, %s63
      %s80 = sphi 0, %s64
      %s86 = sphi 0, %s88
      %s89 = sphi 0, %s86
      %s90 = sphi 0, %s89
      %s106 = sphi 0, %s90
      %s114 = sphi 0, %s116
      %s117 = sphi 0, %s114
      %s118 = sphi 0, %s117
      %s134 = sphi 0, %s118
    $region4: #{tpu_custom_call.1} parent=1 // loop_header_branch
      %15 = sbr.rel (%p13) target = $region8
    $region5: #{tpu_custom_call.1} parent=1 // loop_body
      %s17 = ssub.s32 %s12, 1
      %s18 = ssub.s32 %s12, 2
      %s25 = sadd.s32 1, %s20
      %p26 = scmp.ge.s32.totalorder %s25, 1
      %s27 = scalar_select %p26, 0, %s25
      %s28 = sadd.s32 1, %s19
      %s29 = scalar_select %p26, %s28, %s19
      %p30 = scmp.ge.s32.totalorder %s29, 2
      %s31 = scalar_select %p30, 0, %s29
      %s32 = ssub.s32 %s19, %s31
      %p33 = scmp.eq.s32.totalorder %s32, 0
      %s35 = sadd.s32 %s34, 1
      %s36 = scalar_select %p33, %s34, %s35
      %p39 = pneg %p33
      %p40 = scmp.eq.s32.totalorder %s12, 1
      %p41 = por %p39, %p40
      %p42 = scmp.ne.s32.totalorder %s34, %s37
      %p43 = scmp.eq.s32.totalorder %s12, 0
      %p44 = por %p42, %p43
      %p45 = scmp.ne.s32.totalorder %s34, %s37
      %p46 = scmp.eq.s32.totalorder %s17, 1
      %p47 = por %p45, %p46
      %p48 = scmp.ne.s32.totalorder %s37, %s38
      %p49 = scmp.eq.s32.totalorder %s17, 0
      %p50 = por %p48, %p49
      %p51 = scmp.ne.s32.totalorder %s37, %s38
      %p52 = scmp.eq.s32.totalorder %s18, 1
      %p53 = por %p51, %p52
      %p55 = scmp.ne.s32.totalorder %s38, %s54
      %p56 = scmp.eq.s32.totalorder %s18, 0
      %p57 = por %p55, %p56
      %s58 = ssub.s32 %s20, %s27
      %p59 = scmp.eq.s32.totalorder %s58, 0
      %s61 = sadd.s32 %s60, 1
      %s62 = scalar_select %p59, %s60, %s61
      %p65 = pneg %p59
      %p66 = scmp.eq.s32.totalorder %s12, 1
      %p67 = por %p65, %p66
      %p68 = scmp.ne.s32.totalorder %s60, %s63
      %p69 = scmp.eq.s32.totalorder %s12, 0
      %p70 = por %p68, %p69
      %p71 = scmp.ne.s32.totalorder %s60, %s63
      %p72 = scmp.eq.s32.totalorder %s17, 1
      %p73 = por %p71, %p72
      %p74 = scmp.ne.s32.totalorder %s63, %s64
      %p75 = scmp.eq.s32.totalorder %s17, 0
      %p76 = por %p74, %p75
      %p77 = scmp.ne.s32.totalorder %s63, %s64
      %p78 = scmp.eq.s32.totalorder %s18, 1
      %p79 = por %p77, %p78
      %p81 = scmp.ne.s32.totalorder %s64, %s80
      %p82 = scmp.eq.s32.totalorder %s18, 0
      %p83 = por %p81, %p82
      %s84 = ssub.s32 %s20, %s27
      %p85 = scmp.eq.s32.totalorder %s84, 0
      %s87 = sadd.s32 %s86, 1
      %s88 = scalar_select %p85, %s86, %s87
      %p91 = pneg %p85
      %p92 = scmp.eq.s32.totalorder %s12, 1
      %p93 = por %p91, %p92
      %p94 = scmp.ne.s32.totalorder %s86, %s89
      %p95 = scmp.eq.s32.totalorder %s12, 0
      %p96 = por %p94, %p95
      %p97 = scmp.ne.s32.totalorder %s86, %s89
      %p98 = scmp.eq.s32.totalorder %s17, 1
      %p99 = por %p97, %p98
      %p100 = scmp.ne.s32.totalorder %s89, %s90
      %p101 = scmp.eq.s32.totalorder %s17, 0
      %p102 = por %p100, %p101
      %p103 = scmp.ne.s32.totalorder %s89, %s90
      %p104 = scmp.eq.s32.totalorder %s18, 1
      %p105 = por %p103, %p104
      %p107 = scmp.ne.s32.totalorder %s90, %s106
      %p108 = scmp.eq.s32.totalorder %s18, 0
      %p109 = por %p107, %p108
      %s110 = ssub.s32 %s19, %s31
      %s111 = ssub.s32 %s20, %s27
      %s112 = sor.u32 %s110, %s111
      %p113 = scmp.eq.s32.totalorder %s112, 0
      %s115 = sadd.s32 %s114, 1
      %s116 = scalar_select %p113, %s114, %s115
      %p119 = pneg %p113
      %p120 = scmp.eq.s32.totalorder %s12, 1
      %p121 = por %p119, %p120
      %p122 = scmp.ne.s32.totalorder %s114, %s117
      %p123 = scmp.eq.s32.totalorder %s12, 0
      %p124 = por %p122, %p123
      %p125 = scmp.ne.s32.totalorder %s114, %s117
      %p126 = scmp.eq.s32.totalorder %s17, 1
      %p127 = por %p125, %p126
      %p128 = scmp.ne.s32.totalorder %s117, %s118
      %p129 = scmp.eq.s32.totalorder %s17, 0
      %p130 = por %p128, %p129
      %p131 = scmp.ne.s32.totalorder %s117, %s118
      %p132 = scmp.eq.s32.totalorder %s18, 1
      %p133 = por %p131, %p132
      %p135 = scmp.ne.s32.totalorder %s118, %s134
      %p136 = scmp.eq.s32.totalorder %s18, 0
      %p137 = por %p135, %p136
      %p138 = scmp.le.s32.totalorder 1, %s12
      %p139 = scmp.lt.s32.totalorder %s12, 3
      %p140 = pnand %p138, %p139
      %p141 = pneg %p140
      // Predicated region
      $region9: #{tpu_custom_call.1} parent=5 // pred_check
        _
      $region10: #{tpu_custom_call.1} parent=5 // pred_check_branch
        %143 = sbr.rel (%p140) target = $region12
      $region11: #{tpu_custom_call.1} parent=5 // pred_region
        %s144 = ssub.s32 %s12, 1
        // Predicated region
        $region13: #{tpu_custom_call.1} parent=11 // pred_check
          %p145 = pneg %p76
        $region14: #{tpu_custom_call.1} parent=11 // pred_check_branch
          %147 = sbr.rel (%p145) target = $region16
        $region15: #{tpu_custom_call.1} parent=11 // pred_region
          %p148 = scmp.lt.s32.totalorder %s22, 0
          %s149 = scalar_select %p148, %s22, 0
          %s150 = smul.addr %s149, 4
          %s151 = scalar_lea.vmem %s1, %s150
        $region16: #{tpu_custom_call.1} parent=11 // pred_fallthru
          _
        // Predicated region
        $region17: #{tpu_custom_call.1} parent=11 // pred_check
          %p152 = pneg %p102
        $region18: #{tpu_custom_call.1} parent=11 // pred_check_branch
          %154 = sbr.rel (%p152) target = $region20
        $region19: #{tpu_custom_call.1} parent=11 // pred_region
          %p155 = scmp.lt.s32.totalorder %s22, 0
          %s156 = scalar_select %p155, %s22, 0
          %s157 = scalar_lea.vmem %s2, %s156
        $region20: #{tpu_custom_call.1} parent=11 // pred_fallthru
          _
      $region12: #{tpu_custom_call.1} parent=5 // pred_fallthru
        _
      %p158 = scmp.lt.s32.totalorder %s12, 2
      // Predicated region
      $region21: #{tpu_custom_call.1} parent=5 // pred_check
        %p159 = pneg %p158
      $region22: #{tpu_custom_call.1} parent=5 // pred_check_branch
        %161 = sbr.rel (%p159) target = $region24
      $region23: #{tpu_custom_call.1} parent=5 // pred_region
        // Predicated region
        $region25: #{tpu_custom_call.1} parent=23 // pred_check
          %p162 = pneg %p44
        $region26: #{tpu_custom_call.1} parent=23 // pred_check_branch
          %164 = sbr.rel (%p162) target = $region28
        $region27: #{tpu_custom_call.1} parent=23 // pred_region
          %s165 = smul.u32 32, %s19
          %p166 = scmp.lt.s32.totalorder %s165, 63
          %s167 = scalar_select %p166, %s165, 63
          %s168 = smul.addr %s167, 4
          %s169 = scalar_lea.vmem %s0, %s168
          %s170 = smul.u32 32, %s19
        $region28: #{tpu_custom_call.1} parent=23 // pred_fallthru
          _
      $region24: #{tpu_custom_call.1} parent=5 // pred_fallthru
        _
      %p171 = scmp.le.s32.totalorder 1, %s12
      %p172 = scmp.lt.s32.totalorder %s12, 3
      %p173 = pnand %p171, %p172
      %p174 = pneg %p173
      // Predicated region
      $region29: #{tpu_custom_call.1} parent=5 // pred_check
        _
      $region30: #{tpu_custom_call.1} parent=5 // pred_check_branch
        %176 = sbr.rel (%p173) target = $region32
      $region31: #{tpu_custom_call.1} parent=5 // pred_region
        %s177 = ssub.s32 %s12, 1
        %s178 = smul.u32 32, %s21
        %p179 = scmp.lt.s32.totalorder %s178, 63
        %s180 = scalar_select %p179, %s178, 63
        %s181 = smul.addr %s180, 4
        %s182 = scalar_lea.vmem %s0, %s181
        %p183 = pneg %p50
        %p184 = pneg %p47
        %p185 = scmp.lt.s32.totalorder %s22, 0
        %s186 = scalar_select %p185, %s22, 0
        %s187 = smul.addr %s186, 4
        %s188 = scalar_lea.vmem %s1, %s187
        %p189 = pneg %p76
        %p190 = pneg %p73
        %p191 = scmp.lt.s32.totalorder %s22, 0
        %s192 = scalar_select %p191, %s22, 0
        %s193 = scalar_lea.vmem %s2, %s192
        %p194 = pneg %p102
        %p195 = pneg %p99
        %p196 = pneg %p130
        %p197 = pneg %p127
        %s198 = sand.u32 %s117, 1
        %s199 = scalar_lea.sflag [#allocation3], %s198
        %s200 = sand.u32 %s117, 1
        %s201 = smul.addr %s200, 256
        %s202 = scalar_lea.vmem [#allocation2], %s201
        %s203 = smul.u32 32, %s21
        %p204 = scmp.lt.s32.totalorder %s203, 63
        %s205 = scalar_select %p204, %s203, 63
        %s206 = smul.addr %s205, 4
        %s207 = scalar_lea.vmem %s0, %s206
        %s208 = smul.u32 32, %s21
        %p209 = scmp.lt.s32.totalorder %s22, 0
        %s210 = scalar_select %p209, %s22, 0
        %s211 = smul.addr %s210, 4
        %s212 = scalar_lea.vmem %s1, %s211
        %p213 = scmp.lt.s32.totalorder %s22, 0
        %s214 = scalar_select %p213, %s22, 0
        %s215 = scalar_lea.vmem %s2, %s214
        %s216 = smul.u32 32, %s21
        %v218 = vld [vmem:[%s207] sm:$0xf]
        %v219 = vld [vmem:[%s207 + $0x4] sm:$0xf]
        %v220 = vld [vmem:[%s207 + $0x8] sm:$0xf]
        %v221 = vld [vmem:[%s207 + $0xc] sm:$0xf]
        %v222 = vld [vmem:[%s207 + $0x10] sm:$0xf]
        %v223 = vld [vmem:[%s207 + $0x14] sm:$0xf]
        %v224 = vld [vmem:[%s207 + $0x18] sm:$0xf]
        %v225 = vld [vmem:[%s207 + $0x1c] sm:$0xf]
        %v226 = vld [vmem:[%s207 + $0x20] sm:$0xf]
        %v227 = vld [vmem:[%s207 + $0x24] sm:$0xf]
        %v228 = vld [vmem:[%s207 + $0x28] sm:$0xf]
        %v229 = vld [vmem:[%s207 + $0x2c] sm:$0xf]
        %v230 = vld [vmem:[%s207 + $0x30] sm:$0xf]
        %v231 = vld [vmem:[%s207 + $0x34] sm:$0xf]
        %v232 = vld [vmem:[%s207 + $0x38] sm:$0xf]
        %v233 = vld [vmem:[%s207 + $0x3c] sm:$0xf]
        %v234 = vld [vmem:[%s207 + $0x40] sm:$0xf]
        %v235 = vld [vmem:[%s207 + $0x44] sm:$0xf]
        %v236 = vld [vmem:[%s207 + $0x48] sm:$0xf]
        %v237 = vld [vmem:[%s207 + $0x4c] sm:$0xf]
        %v238 = vld [vmem:[%s207 + $0x50] sm:$0xf]
        %v239 = vld [vmem:[%s207 + $0x54] sm:$0xf]
        %v240 = vld [vmem:[%s207 + $0x58] sm:$0xf]
        %v241 = vld [vmem:[%s207 + $0x5c] sm:$0xf]
        %v242 = vld [vmem:[%s207 + $0x60] sm:$0xf]
        %v243 = vld [vmem:[%s207 + $0x64] sm:$0xf]
        %v244 = vld [vmem:[%s207 + $0x68] sm:$0xf]
        %v245 = vld [vmem:[%s207 + $0x6c] sm:$0xf]
        %v246 = vld [vmem:[%s207 + $0x70] sm:$0xf]
        %v247 = vld [vmem:[%s207 + $0x74] sm:$0xf]
        %v248 = vld [vmem:[%s207 + $0x78] sm:$0xf]
        %v249 = vld [vmem:[%s207 + $0x7c] sm:$0xf]
        %v250 = vld [vmem:[%s212] sm:$0xf]
        %v251 = vld [vmem:[%s212 + $0x4] sm:$0xf]
        %v252 = vld [vmem:[%s212 + $0x8] sm:$0xf]
        %v253 = vld [vmem:[%s212 + $0xc] sm:$0xf]
        %v254 = vld [vmem:[%s212 + $0x10] sm:$0x3]
        %v255 = vld [vmem:[%s215] sm:$0x1]
        %v257 = vlaneseq
        %v258 = vshrl.u32 %v257, 7
        %v259 = vsub.s32 0, %v258
        %v260 = vrot.slane %v255, %v259
        %v294 = vunpack.c.l.b16 %v218
        %v295 = vunpack.c.l.b16 %v219
        %v296 = vunpack.c.l.b16 %v220
        %v297 = vunpack.c.l.b16 %v221
        %v298 = vunpack.c.l.b16 %v222
        %v299 = vunpack.c.l.b16 %v223
        %v300 = vunpack.c.l.b16 %v224
        %v301 = vunpack.c.l.b16 %v225
        %v302 = vunpack.c.l.b16 %v226
        %v303 = vunpack.c.l.b16 %v227
        %v304 = vunpack.c.l.b16 %v228
        %v305 = vunpack.c.l.b16 %v229
        %v306 = vunpack.c.l.b16 %v230
        %v307 = vunpack.c.l.b16 %v231
        %v308 = vunpack.c.l.b16 %v232
        %v309 = vunpack.c.l.b16 %v233
        %v310 = vunpack.c.l.b16 %v234
        %v311 = vunpack.c.l.b16 %v235
        %v312 = vunpack.c.l.b16 %v236
        %v313 = vunpack.c.l.b16 %v237
        %v314 = vunpack.c.l.b16 %v238
        %v315 = vunpack.c.l.b16 %v239
        %v316 = vunpack.c.l.b16 %v240
        %v317 = vunpack.c.l.b16 %v241
        %v318 = vunpack.c.l.b16 %v242
        %v319 = vunpack.c.l.b16 %v243
        %v320 = vunpack.c.l.b16 %v244
        %v321 = vunpack.c.l.b16 %v245
        %v322 = vunpack.c.l.b16 %v246
        %v323 = vunpack.c.l.b16 %v247
        %v324 = vunpack.c.l.b16 %v248
        %v325 = vunpack.c.l.b16 %v249
        %v326 = vpack.c.b16 %v295, %v294
        %v327 = vpack.c.b16 %v297, %v296
        %v328 = vpack.c.b16 %v299, %v298
        %v329 = vpack.c.b16 %v301, %v300
        %v330 = vpack.c.b16 %v303, %v302
        %v331 = vpack.c.b16 %v305, %v304
        %v332 = vpack.c.b16 %v307, %v306
        %v333 = vpack.c.b16 %v309, %v308
        %v334 = vpack.c.b16 %v311, %v310
        %v335 = vpack.c.b16 %v313, %v312
        %v336 = vpack.c.b16 %v315, %v314
        %v337 = vpack.c.b16 %v317, %v316
        %v338 = vpack.c.b16 %v319, %v318
        %v339 = vpack.c.b16 %v321, %v320
        %v340 = vpack.c.b16 %v323, %v322
        %v341 = vpack.c.b16 %v325, %v324
        %v347 = vunpack.c.l.b16 %v250
        %v348 = vunpack.c.l.b16 %v251
        %v349 = vunpack.c.l.b16 %v252
        %v350 = vunpack.c.l.b16 %v253
        %v351 = vunpack.c.l.b16 %v254
        %v352 = vpack.c.b16 %v348, %v347
        %v353 = vpack.c.b16 %v350, %v349
        %v354 = vpack.c.b16 %v351, %v351
        %vm357 = vcmask 293888
        %v359 = vsel %vm357, %v326, 0
        %v362 = vsel %vm357, %v327, 0
        %v365 = vsel %vm357, %v328, 0
        %v368 = vsel %vm357, %v329, 0
        %v371 = vsel %vm357, %v330, 0
        %v374 = vsel %vm357, %v331, 0
        %v377 = vsel %vm357, %v332, 0
        %v380 = vsel %vm357, %v333, 0
        %v383 = vsel %vm357, %v334, 0
        %v386 = vsel %vm357, %v335, 0
        %v389 = vsel %vm357, %v336, 0
        %v392 = vsel %vm357, %v337, 0
        %v395 = vsel %vm357, %v338, 0
        %v398 = vsel %vm357, %v339, 0
        %v401 = vsel %vm357, %v340, 0
        %v404 = vsel %vm357, %v341, 0
        %vm406 = vcmask 1041408
        %v408 = vsel %vm406, %v354, 0
        %410 = vmatprep.subr.bf16.mxu0 0
        %411 = vmatpush1.bf16.msra.mxu0 %v352
        %412 = vmatprep.subr.bf16.mxu0 0
        %413 = vmatpush1.bf16.msra.mxu0 %v353
        %414 = vmatprep.subr.bf16.mxu0 0
        %415 = vmatpush1.bf16.msra.mxu0 %v408
        %416 = vmatprep.subr.bf16.mxu0 0
        %417 = vmatpush1.bf16.msra.mxu0 0
        %418 = vmatprep.subr.bf16.mxu0 0
        %419 = vmatpush1.bf16.msra.mxu0 0
        %420 = vmatprep.subr.bf16.mxu0 0
        %421 = vmatpush1.bf16.msra.mxu0 0
        %422 = vmatprep.subr.bf16.mxu0 0
        %423 = vmatpush1.bf16.msra.mxu0 0
        %424 = vmatprep.subr.bf16.mxu0 0
        %425 = vmatpush1.bf16.msra.mxu0 0
        %426 = vmatprep.subr.bf16.mxu0 0
        %427 = vmatpush1.bf16.msra.mxu0 0
        %428 = vmatprep.subr.bf16.mxu0 0
        %429 = vmatpush1.bf16.msra.mxu0 0
        %430 = vmatprep.subr.bf16.mxu0 0
        %431 = vmatpush1.bf16.msra.mxu0 0
        %432 = vmatprep.subr.bf16.mxu0 0
        %433 = vmatpush1.bf16.msra.mxu0 0
        %434 = vmatprep.subr.bf16.mxu0 0
        %435 = vmatpush1.bf16.msra.mxu0 0
        %436 = vmatprep.subr.bf16.mxu0 0
        %437 = vmatpush1.bf16.msra.mxu0 0
        %438 = vmatprep.subr.bf16.mxu0 0
        %439 = vmatpush1.bf16.msra.mxu0 0
        %440 = vmatprep.subr.bf16.mxu0 0
        %441 = vmatpush1.bf16.msra.mxu0 0
        %442 = vmatprep.mubr.bf16.mxu0 0
        %443 = vmatmul.mubr.bf16.gmra.mrb[0].mxu0 %v359
        %v444 = vpop.f32.mrb[0].mxu0
        %v445 = vadd.f32 %v260, %v444
        %v446 = vpop.f32.mrb[0].mxu0
        %v447 = vpop.f32.mrb[0].mxu0
        %v448 = vadd.f32 %v260, %v447
        %v449 = vpop.f32.mrb[0].mxu0
        %450 = vmatprep.mubr.bf16.mxu0 0
        %451 = vmatmul.mubr.bf16.gmra.mrb[0].mxu0 %v362
        %v452 = vpop.f32.mrb[0].mxu0
        %v453 = vadd.f32 %v260, %v452
        %v454 = vpop.f32.mrb[0].mxu0
        %v455 = vpop.f32.mrb[0].mxu0
        %v456 = vadd.f32 %v260, %v455
        %v457 = vpop.f32.mrb[0].mxu0
        %458 = vmatprep.mubr.bf16.mxu0 0
        %459 = vmatmul.mubr.bf16.gmra.mrb[0].mxu0 %v365
        %v460 = vpop.f32.mrb[0].mxu0
        %v461 = vadd.f32 %v260, %v460
        %v462 = vpop.f32.mrb[0].mxu0
        %v463 = vpop.f32.mrb[0].mxu0
        %v464 = vadd.f32 %v260, %v463
        %v465 = vpop.f32.mrb[0].mxu0
        %466 = vmatprep.mubr.bf16.mxu0 0
        %467 = vmatmul.mubr.bf16.gmra.mrb[0].mxu0 %v368
        %v468 = vpop.f32.mrb[0].mxu0
        %v469 = vadd.f32 %v260, %v468
        %v470 = vpop.f32.mrb[0].mxu0
        %v471 = vpop.f32.mrb[0].mxu0
        %v472 = vadd.f32 %v260, %v471
        %v473 = vpop.f32.mrb[0].mxu0
        %474 = vmatprep.mubr.bf16.mxu0 0
        %475 = vmatmul.mubr.bf16.gmra.mrb[0].mxu0 %v371
        %v476 = vpop.f32.mrb[0].mxu0
        %v477 = vadd.f32 %v260, %v476
        %v478 = vpop.f32.mrb[0].mxu0
        %v479 = vpop.f32.mrb[0].mxu0
        %v480 = vadd.f32 %v260, %v479
        %v481 = vpop.f32.mrb[0].mxu0
        %482 = vmatprep.mubr.bf16.mxu0 0
        %483 = vmatmul.mubr.bf16.gmra.mrb[0].mxu0 %v374
        %v484 = vpop.f32.mrb[0].mxu0
        %v485 = vadd.f32 %v260, %v484
        %v486 = vpop.f32.mrb[0].mxu0
        %v487 = vpop.f32.mrb[0].mxu0
        %v488 = vadd.f32 %v260, %v487
        %v489 = vpop.f32.mrb[0].mxu0
        %490 = vmatprep.mubr.bf16.mxu0 0
        %491 = vmatmul.mubr.bf16.gmra.mrb[0].mxu0 %v377
        %v492 = vpop.f32.mrb[0].mxu0
        %v493 = vadd.f32 %v260, %v492
        %v494 = vpop.f32.mrb[0].mxu0
        %v495 = vpop.f32.mrb[0].mxu0
        %v496 = vadd.f32 %v260, %v495
        %v497 = vpop.f32.mrb[0].mxu0
        %498 = vmatprep.mubr.bf16.mxu0 0
        %499 = vmatmul.mubr.bf16.gmra.mrb[0].mxu0 %v380
        %v500 = vpop.f32.mrb[0].mxu0
        %v501 = vadd.f32 %v260, %v500
        %v502 = vpop.f32.mrb[0].mxu0
        %v503 = vpop.f32.mrb[0].mxu0
        %v504 = vadd.f32 %v260, %v503
        %v505 = vpop.f32.mrb[0].mxu0
        %506 = vmatprep.mubr.bf16.mxu0 0
        %507 = vmatmul.mubr.bf16.gmra.mrb[0].mxu0 %v383
        %v508 = vpop.f32.mrb[0].mxu0
        %v509 = vadd.f32 %v260, %v508
        %v510 = vpop.f32.mrb[0].mxu0
        %v511 = vpop.f32.mrb[0].mxu0
        %v512 = vadd.f32 %v260, %v511
        %v513 = vpop.f32.mrb[0].mxu0
        %514 = vmatprep.mubr.bf16.mxu0 0
        %515 = vmatmul.mubr.bf16.gmra.mrb[0].mxu0 %v386
        %v516 = vpop.f32.mrb[0].mxu0
        %v517 = vadd.f32 %v260, %v516
        %v518 = vpop.f32.mrb[0].mxu0
        %v519 = vpop.f32.mrb[0].mxu0
        %v520 = vadd.f32 %v260, %v519
        %v521 = vpop.f32.mrb[0].mxu0
        %522 = vmatprep.mubr.bf16.mxu0 0
        %523 = vmatmul.mubr.bf16.gmra.mrb[0].mxu0 %v389
        %v524 = vpop.f32.mrb[0].mxu0
        %v525 = vadd.f32 %v260, %v524
        %v526 = vpop.f32.mrb[0].mxu0
        %v527 = vpop.f32.mrb[0].mxu0
        %v528 = vadd.f32 %v260, %v527
        %v529 = vpop.f32.mrb[0].mxu0
        %530 = vmatprep.mubr.bf16.mxu0 0
        %531 = vmatmul.mubr.bf16.gmra.mrb[0].mxu0 %v392
        %v532 = vpop.f32.mrb[0].mxu0
        %v533 = vadd.f32 %v260, %v532
        %v534 = vpop.f32.mrb[0].mxu0
        %v535 = vpop.f32.mrb[0].mxu0
        %v536 = vadd.f32 %v260, %v535
        %v537 = vpop.f32.mrb[0].mxu0
        %538 = vmatprep.mubr.bf16.mxu0 0
        %539 = vmatmul.mubr.bf16.gmra.mrb[0].mxu0 %v395
        %v540 = vpop.f32.mrb[0].mxu0
        %v541 = vadd.f32 %v260, %v540
        %v542 = vpop.f32.mrb[0].mxu0
        %v543 = vpop.f32.mrb[0].mxu0
        %v544 = vadd.f32 %v260, %v543
        %v545 = vpop.f32.mrb[0].mxu0
        %546 = vmatprep.mubr.bf16.mxu0 0
        %547 = vmatmul.mubr.bf16.gmra.mrb[0].mxu0 %v398
        %v548 = vpop.f32.mrb[0].mxu0
        %v549 = vadd.f32 %v260, %v548
        %v550 = vpop.f32.mrb[0].mxu0
        %v551 = vpop.f32.mrb[0].mxu0
        %v552 = vadd.f32 %v260, %v551
        %v553 = vpop.f32.mrb[0].mxu0
        %554 = vmatprep.mubr.bf16.mxu0 0
        %555 = vmatmul.mubr.bf16.gmra.mrb[0].mxu0 %v401
        %v556 = vpop.f32.mrb[0].mxu0
        %v557 = vadd.f32 %v260, %v556
        %v558 = vpop.f32.mrb[0].mxu0
        %v559 = vpop.f32.mrb[0].mxu0
        %v560 = vadd.f32 %v260, %v559
        %v561 = vpop.f32.mrb[0].mxu0
        %562 = vmatprep.mubr.bf16.mxu0 0
        %563 = vmatmul.mubr.bf16.gmra.mrb[0].mxu0 %v404
        %v564 = vpop.f32.mrb[0].mxu0
        %v565 = vadd.f32 %v260, %v564
        %v566 = vpop.f32.mrb[0].mxu0
        %v567 = vpop.f32.mrb[0].mxu0
        %v568 = vadd.f32 %v260, %v567
        %v569 = vpop.f32.mrb[0].mxu0
        %570 = vdwg.mxu0
        %571 = vst [vmem:[%s202] sm:$0xff] %v445
        %572 = vst [vmem:[%s202 + $0x8] sm:$0xff] %v448
        %573 = vst [vmem:[%s202 + $0x10] sm:$0xff] %v453
        %574 = vst [vmem:[%s202 + $0x18] sm:$0xff] %v456
        %575 = vst [vmem:[%s202 + $0x20] sm:$0xff] %v461
        %576 = vst [vmem:[%s202 + $0x28] sm:$0xff] %v464
        %577 = vst [vmem:[%s202 + $0x30] sm:$0xff] %v469
        %578 = vst [vmem:[%s202 + $0x38] sm:$0xff] %v472
        %579 = vst [vmem:[%s202 + $0x40] sm:$0xff] %v477
        %580 = vst [vmem:[%s202 + $0x48] sm:$0xff] %v480
        %581 = vst [vmem:[%s202 + $0x50] sm:$0xff] %v485
        %582 = vst [vmem:[%s202 + $0x58] sm:$0xff] %v488
        %583 = vst [vmem:[%s202 + $0x60] sm:$0xff] %v493
        %584 = vst [vmem:[%s202 + $0x68] sm:$0xff] %v496
        %585 = vst [vmem:[%s202 + $0x70] sm:$0xff] %v501
        %586 = vst [vmem:[%s202 + $0x78] sm:$0xff] %v504
        %587 = vst [vmem:[%s202 + $0x80] sm:$0xff] %v509
        %588 = vst [vmem:[%s202 + $0x88] sm:$0xff] %v512
        %589 = vst [vmem:[%s202 + $0x90] sm:$0xff] %v517
        %590 = vst [vmem:[%s202 + $0x98] sm:$0xff] %v520
        %591 = vst [vmem:[%s202 + $0xa0] sm:$0xff] %v525
        %592 = vst [vmem:[%s202 + $0xa8] sm:$0xff] %v528
        %593 = vst [vmem:[%s202 + $0xb0] sm:$0xff] %v533
        %594 = vst [vmem:[%s202 + $0xb8] sm:$0xff] %v536
        %595 = vst [vmem:[%s202 + $0xc0] sm:$0xff] %v541
        %596 = vst [vmem:[%s202 + $0xc8] sm:$0xff] %v544
        %597 = vst [vmem:[%s202 + $0xd0] sm:$0xff] %v549
        %598 = vst [vmem:[%s202 + $0xd8] sm:$0xff] %v552
        %599 = vst [vmem:[%s202 + $0xe0] sm:$0xff] %v557
        %600 = vst [vmem:[%s202 + $0xe8] sm:$0xff] %v560
        %601 = vst [vmem:[%s202 + $0xf0] sm:$0xff] %v565
        %602 = vst [vmem:[%s202 + $0xf8] sm:$0xff] %v568
        %s603 = sand.u32 %s117, 1
        %s604 = scalar_lea.sflag [#allocation3], %s603
        %s605 = sand.u32 %s117, 1
        %s606 = smul.addr %s605, 256
        %s607 = scalar_lea.vmem [#allocation2], %s606
        // Predicated region
        $region33: #{tpu_custom_call.1} parent=31 // pred_check
          %p608 = pneg %p127
        $region34: #{tpu_custom_call.1} parent=31 // pred_check_branch
          %610 = sbr.rel (%p608) target = $region36
        $region35: #{tpu_custom_call.1} parent=31 // pred_region
          %s611 = smul.u32 32, %s21
          %s613 = ssub.s32 4096, 4096
          %614 = vsyncadd %s604, %s613
          %s615 = sadd.s32 %s22, %s611
          %s616 = smul.addr %s615, 128
          %s617 = scalar_lea.hbm %s3, %s616
          %s618 = sshll.u32 %s607, 4
          %s619 = int_to_ptr.vmem [resolvable:$true] %s618
          %624 = dma.vmem_to_hbm [thread:$0]  %s619, 4096, %s617, %s604, 128, 128, 8
        $region36: #{tpu_custom_call.1} parent=31 // pred_fallthru
          _
      $region32: #{tpu_custom_call.1} parent=5 // pred_fallthru
        _
      %p625 = scmp.le.s32.totalorder 2, %s12
      // Predicated region
      $region37: #{tpu_custom_call.1} parent=5 // pred_check
        %p626 = pneg %p625
      $region38: #{tpu_custom_call.1} parent=5 // pred_check_branch
        %628 = sbr.rel (%p626) target = $region40
      $region39: #{tpu_custom_call.1} parent=5 // pred_region
        %s629 = ssub.s32 %s12, 2
        // Predicated region
        $region41: #{tpu_custom_call.1} parent=39 // pred_check
          %p630 = pneg %p133
        $region42: #{tpu_custom_call.1} parent=39 // pred_check_branch
          %632 = sbr.rel (%p630) target = $region44
        $region43: #{tpu_custom_call.1} parent=39 // pred_region
          %s633 = sand.u32 %s118, 1
          %s634 = scalar_lea.sflag [#allocation3], %s633
          %s635 = sand.u32 %s118, 1
          %s636 = smul.addr %s635, 256
          %s637 = scalar_lea.vmem [#allocation2], %s636
          %638 = dma.done %s634, 4096
        $region44: #{tpu_custom_call.1} parent=39 // pred_fallthru
          _
      $region40: #{tpu_custom_call.1} parent=5 // pred_fallthru
        _
    $region6: #{tpu_custom_call.1} parent=1 // loop_footer
      %s16 = sadd.s32 1, %s12
    $region7: #{tpu_custom_call.1} parent=1 // loop_footer_branch
      %11 = sbr.rel target = $region3
    $region8: #{tpu_custom_call.1} parent=1 // loop_exit
      _
    %639 = vsyncpa [#allocation3], 1
    %s640 = scalar_lea.sflag [#allocation3], 1
    %641 = vsyncpa %s640, 1

</llo_original>
